<compile_context>
chip_gen: v7x
topology: tpu7x:2x2x1
jax: 0.10.0
libtpu: 0.0.40
codegen_flags: <defaults>
</compile_context>

<pallas_src>
import functools

import jax
import jax.numpy as jnp
from jax.experimental import pallas as pl
from jax.experimental.pallas import tpu as pltpu


def _round_up(x, m):
    return (x + m - 1) // m * m


def _linear_kernel(x_ref, w_ref, b_ref, o_ref):
    # x_ref: (tm, Fp) f32   w_ref: (Fp, Cp) bf16 (VMEM-resident across grid)
    # b_ref: (1, Cp) f32    o_ref: (tm, Cp) f32
    x = x_ref[...].astype(jnp.bfloat16)          # in-kernel cast (VPU, free slot)
    acc = jnp.dot(x, w_ref[...], preferred_element_type=jnp.float32)
    o_ref[...] = (acc + b_ref[...]).astype(o_ref.dtype)


def prepare_linear_params(weight, bias):
    """One-time parameter prep (NOT per forward call).

    weight: [C, F] (PyTorch nn.Linear layout), bias: [C].
    Returns:
      w_fc: [Fp, Cp] bf16, weight transposed once and zero-padded
            (Fp = round_up(F, 128), Cp = round_up(C, 128), lane-dense).
      b2d : [1, Cp] f32, zero-padded bias.
    """
    C, F = weight.shape
    Cp = _round_up(C, 128)
    Fp = _round_up(F, 128)
    w_fc = jnp.zeros((Fp, Cp), jnp.float32).at[:F, :C].set(weight.T)
    b2d = jnp.zeros((1, Cp), jnp.float32).at[0, :C].set(bias)
    return w_fc.astype(jnp.bfloat16), b2d


@functools.partial(jax.jit, static_argnames=("num_classes", "tm"))
def linear_classifier(features, w_fc, b2d, *, num_classes, tm):
    """features: [B, F] f32; w_fc: [Fp, Cp] bf16 (prepared); b2d: [1, Cp] f32."""
    B, F = features.shape
    Fp, Cp = w_fc.shape
    assert Fp >= F and Fp % 128 == 0 and Cp % 128 == 0
    assert tm % 8 == 0

    Bp = _round_up(B, tm)
    assert Bp % tm == 0

    x = features
    if (Bp, Fp) != (B, F):
        x = jnp.pad(x, ((0, Bp - B), (0, Fp - F)))

    n_m = Bp // tm

    # Weight read once; activations streamed once (f32); output written once.
    cost = pl.CostEstimate(
        flops=2 * Bp * Fp * Cp,
        transcendentals=0,
        bytes_accessed=Bp * Fp * 4 + Fp * Cp * 2 + Cp * 4 + Bp * Cp * 4,
    )

    # VMEM working set: resident weight + double-buffered x/bias/out tiles.
    vmem_needed = (
        2 * (tm * Fp * 4)      # x tiles (f32, double-buffered)
        + 2 * (Fp * Cp * 2)    # weight (bf16; budget double-buffer conservatively)
        + 2 * (Cp * 4)         # bias
        + 2 * (tm * Cp * 4)    # out tiles (f32)
    )
    vmem_limit = int(min(100 * 1024 * 1024,
                         max(32 * 1024 * 1024, 2 * vmem_needed)))

    out = pl.pallas_call(
        _linear_kernel,
        out_shape=jax.ShapeDtypeStruct((Bp, Cp), features.dtype),
        grid_spec=pltpu.PrefetchScalarGridSpec(
            num_scalar_prefetch=0,
            grid=(n_m,),                                       # M-only, parallel
            in_specs=[
                pl.BlockSpec((tm, Fp), lambda i: (i, 0)),      # activation tile
                pl.BlockSpec((Fp, Cp), lambda i: (0, 0)),      # weight, VMEM-resident
                pl.BlockSpec((1, Cp), lambda i: (0, 0)),       # bias, VMEM-resident
            ],
            out_specs=pl.BlockSpec((tm, Cp), lambda i: (i, 0)),
        ),
        compiler_params=pltpu.CompilerParams(
            dimension_semantics=("parallel",),
            vmem_limit_bytes=vmem_limit,
        ),
        cost_estimate=cost,
    )(x, w_fc, b2d)

    # Slice padded rows/classes back off (padded bias/weight cols are zero).
    return out[:B, :num_classes]


if __name__ == "__main__":
    # Small shapes consistent with the module: batch=8, feat_dim=256, num_classes=10
    B, F, C = 8, 256, 10

    # M tile: multiple of 8 sublanes, up to 512 rows, capped by (padded) batch.
    tm = min(512, _round_up(B, 8))

    key = jax.random.PRNGKey(0)
    kx, kw, kb = jax.random.split(key, 3)

    # Deterministic init mimicking nn.Linear default (uniform +/- 1/sqrt(F)).
    bound = 1.0 / (F ** 0.5)
    weight = jax.random.uniform(kw, (C, F), jnp.float32, -bound, bound)  # [out, in]
    bias = jax.random.uniform(kb, (C,), jnp.float32, -bound, bound)
    features = jax.random.normal(kx, (B, F), jnp.float32)

    # One-time param prep (transpose + pad); reused across calls.
    w_fc, b2d = prepare_linear_params(weight, bias)

    out = linear_classifier(features, w_fc, b2d, num_classes=C, tm=tm)
    out = jax.block_until_ready(out)

    # Sanity check against plain-JAX f32 reference (bf16 MXU inputs -> loose tol).
    ref = features @ weight.T + bias
    assert out.shape == (B, C)
    assert jnp.allclose(out, ref, atol=2e-2, rtol=2e-2)
    print("KERNEL_OK")
</pallas_src>

<mosaic_0001>
module attributes {stable_mosaic.version = 11 : i64} {
  func.func @_linear_kernel(%arg0: i32, %arg1: memref<8x256xf32, #tpu.memory_space<vmem>>, %arg2: memref<256x128xbf16, #tpu.memory_space<vmem>>, %arg3: memref<1x128xf32, #tpu.memory_space<vmem>>, %arg4: memref<8x128xf32, #tpu.memory_space<vmem>>) attributes {dimension_semantics = [#tpu.dimension_semantics<parallel>], iteration_bounds = array<i64: 1>, scalar_prefetch = 0 : i64, scratch_operands = 0 : i64, tpu.core_type = #tpu.core_type<tc>, window_params = [{transform_indices = @transform_0, window_bounds = array<i64: 8, 256>}, {pipeline_mode = #tpu.pipeline_mode<synchronous>, transform_indices = @transform_1, window_bounds = array<i64: 256, 128>}, {pipeline_mode = #tpu.pipeline_mode<synchronous>, transform_indices = @transform_2, window_bounds = array<i64: 1, 128>}, {transform_indices = @transform_3, window_bounds = array<i64: 8, 128>}]} {
    %c0 = arith.constant 0 : index
    %c0_0 = arith.constant 0 : index
    %0 = vector.load %arg1[%c0, %c0_0] : memref<8x256xf32, #tpu.memory_space<vmem>>, vector<8x256xf32>
    %1 = arith.truncf %0 : vector<8x256xf32> to vector<8x256xbf16>
    %c0_1 = arith.constant 0 : index
    %c0_2 = arith.constant 0 : index
    %2 = vector.load %arg2[%c0_1, %c0_2] : memref<256x128xbf16, #tpu.memory_space<vmem>>, vector<256x128xbf16>
    %cst = arith.constant dense<0.000000e+00> : vector<8x128xf32>
    %3 = tpu.matmul %1, %2, %cst {dimension_numbers = #tpu.dot_dimension_numbers<[1], [0], [0], [1], [0, 0, 1, 1], [], []>} : vector<8x256xbf16>, vector<256x128xbf16>, vector<8x128xf32> -> vector<8x128xf32>
    %c0_3 = arith.constant 0 : index
    %c0_4 = arith.constant 0 : index
    %4 = vector.load %arg3[%c0_3, %c0_4] : memref<1x128xf32, #tpu.memory_space<vmem>>, vector<1x128xf32>
    %5 = vector.broadcast %4 : vector<1x128xf32> to vector<8x128xf32>
    %6 = arith.addf %3, %5 : vector<8x128xf32>
    %c0_5 = arith.constant 0 : index
    %c0_6 = arith.constant 0 : index
    %7 = vector.load %arg4[%c0_5, %c0_6] : memref<8x128xf32, #tpu.memory_space<vmem>>, vector<8x128xf32>
    tpu.vector_store %arg4[%c0_5, %c0_6], %6 {strides = array<i32>} : memref<8x128xf32, #tpu.memory_space<vmem>>, vector<8x128xf32>,
    return
  }
  func.func @transform_0(%arg0: i32) -> (i32, i32) {
    %c0_i32 = arith.constant 0 : i32
    %c0_i32_0 = arith.constant 0 : i32
    return %arg0, %c0_i32 : i32, i32
  }
  func.func @transform_1(%arg0: i32) -> (i32, i32) {
    %c0_i32 = arith.constant 0 : i32
    %c0_i32_0 = arith.constant 0 : i32
    %c0_i32_1 = arith.constant 0 : i32
    return %c0_i32, %c0_i32_0 : i32, i32
  }
  func.func @transform_2(%arg0: i32) -> (i32, i32) {
    %c0_i32 = arith.constant 0 : i32
    %c0_i32_0 = arith.constant 0 : i32
    %c0_i32_1 = arith.constant 0 : i32
    return %c0_i32, %c0_i32_0 : i32, i32
  }
  func.func @transform_3(%arg0: i32) -> (i32, i32) {
    %c0_i32 = arith.constant 0 : i32
    %c0_i32_0 = arith.constant 0 : i32
    return %arg0, %c0_i32 : i32, i32
  }
}

</mosaic_0001>

<llo_original>
// kernel: linear_classifier.1
$region0: #{linear_classifier.1}
  #allocation0 [shape = 'u32[]', space=smem, size = 0x4, offset = 0x4, fixed_abs, tag = 'smem constant byte address 0x4 - core index']
  #allocation1 [shape = 'u32[144,128]{1,0:T(1,128)}', space=vmem, size = 0x12000, scoped, tag = 'internal scratch']
  %s0 = inlined_call_operand.hbm [shape: f32[8,256], index: 0, kind: input, shape index: {}]
  %s1 = inlined_call_operand.hbm [shape: bf16[256,128], index: 1, kind: input, shape index: {}]
  %s2 = inlined_call_operand.vmem [shape: f32[1,128], index: 2, kind: input, shape index: {}]
  %s3 = inlined_call_operand.hbm [shape: f32[8,128], index: 3, kind: output, shape index: {}]
  %s4 = sld [smem:[#allocation0]]
  $region30: #{linear_classifier.1} parent=0
    _
  %s6 = ssub.s32 1, %s4
  %s7 = scalar_select 0, %s6, %s4
  $region1: #{linear_classifier.1} parent=0
    #allocation2 [shape = 'u8[8192]{0}', space=vmem, size = 0x2000, scoped, tag = 'input window, operand 0, single buffered']
    #allocation3 [shape = 's32[1]{0}', space=sflag, size = 0x4, scoped, tag = 'scoped memory for linear_classifier.1']
    #allocation4 [shape = 's32[1]{0}', space=sflag, size = 0x4, scoped, tag = 'scoped memory for linear_classifier.1']
    #allocation5 [shape = 'u8[65536]{0}', space=vmem, size = 0x10000, scoped, tag = 'input window, operand 1, single buffered']
    #allocation6 [shape = 's32[1]{0}', space=sflag, size = 0x4, scoped, tag = 'scoped memory for linear_classifier.1']
    #allocation7 [shape = 'u8[4096]{0}', space=vmem, size = 0x1000, scoped, tag = 'output window, operand 0, single buffered']
    %8 = vsyncpa [#allocation3], 0
    %9 = vsyncpa [#allocation6], 0
    %10 = vsyncpa [#allocation4], 0
    // Predicated region
    $region2: #{linear_classifier.1} parent=1 // pred_check
      _
    $region3: #{linear_classifier.1} parent=1 // pred_check_branch
      %12 = sbr.rel (0) target = $region5
    $region4: #{linear_classifier.1} parent=1 // pred_region
      %s14 = ssub.s32 256, 256
      %15 = vsyncadd [#allocation3], %s14
      %s17 = sshll.u32 [#allocation2], 4
      %s18 = int_to_ptr.vmem [resolvable:$true] %s17
      %20 = dma.hbm_to_vmem [thread:$0]  %s0, 256, %s18, [#allocation3]
    $region5: #{linear_classifier.1} parent=1 // pred_fallthru
      _
    // Predicated region
    $region6: #{linear_classifier.1} parent=1 // pred_check
      _
    $region7: #{linear_classifier.1} parent=1 // pred_check_branch
      %22 = sbr.rel (0) target = $region9
    $region8: #{linear_classifier.1} parent=1 // pred_region
      %s24 = ssub.s32 2048, 2048
      %25 = vsyncadd [#allocation6], %s24
      %s26 = sshll.u32 [#allocation5], 4
      %s27 = int_to_ptr.vmem [resolvable:$true] %s26
      %32 = dma.hbm_to_vmem [thread:$0]  %s1, 2048, %s27, [#allocation6], 64, 64, 4
    $region9: #{linear_classifier.1} parent=1 // pred_fallthru
      _
    // Predicated region
    $region10: #{linear_classifier.1} parent=1 // pred_check
      _
    $region11: #{linear_classifier.1} parent=1 // pred_check_branch
      %34 = sbr.rel (0) target = $region13
    $region12: #{linear_classifier.1} parent=1 // pred_region
      _
    $region13: #{linear_classifier.1} parent=1 // pred_fallthru
      _
    // Predicated region
    $region14: #{linear_classifier.1} parent=1 // pred_check
      _
    $region15: #{linear_classifier.1} parent=1 // pred_check_branch
      %36 = sbr.rel (0) target = $region17
    $region16: #{linear_classifier.1} parent=1 // pred_region
      %37 = dma.done [#allocation3], 256
    $region17: #{linear_classifier.1} parent=1 // pred_fallthru
      _
    // Predicated region
    $region18: #{linear_classifier.1} parent=1 // pred_check
      _
    $region19: #{linear_classifier.1} parent=1 // pred_check_branch
      %39 = sbr.rel (0) target = $region21
    $region20: #{linear_classifier.1} parent=1 // pred_region
      %40 = dma.done [#allocation6], 2048
    $region21: #{linear_classifier.1} parent=1 // pred_fallthru
      _
    %v42 = vld [vmem:[#allocation2] sm:$0xff]
    %v43 = vld [vmem:[#allocation2 + $0x8] sm:$0xff]
    %v44 = vpack.c.bf16 %v42, %v42
    %v45 = vpack.c.bf16 %v43, %v43
    %v46 = vld [vmem:[#allocation5] sm:$0xf]
    %v47 = vld [vmem:[#allocation5 + $0x4] sm:$0xf]
    %v48 = vld [vmem:[#allocation5 + $0x8] sm:$0xf]
    %v49 = vld [vmem:[#allocation5 + $0xc] sm:$0xf]
    %v50 = vld [vmem:[#allocation5 + $0x10] sm:$0xf]
    %v51 = vld [vmem:[#allocation5 + $0x14] sm:$0xf]
    %v52 = vld [vmem:[#allocation5 + $0x18] sm:$0xf]
    %v53 = vld [vmem:[#allocation5 + $0x1c] sm:$0xf]
    %v54 = vld [vmem:[#allocation5 + $0x20] sm:$0xf]
    %v55 = vld [vmem:[#allocation5 + $0x24] sm:$0xf]
    %v56 = vld [vmem:[#allocation5 + $0x28] sm:$0xf]
    %v57 = vld [vmem:[#allocation5 + $0x2c] sm:$0xf]
    %v58 = vld [vmem:[#allocation5 + $0x30] sm:$0xf]
    %v59 = vld [vmem:[#allocation5 + $0x34] sm:$0xf]
    %v60 = vld [vmem:[#allocation5 + $0x38] sm:$0xf]
    %v61 = vld [vmem:[#allocation5 + $0x3c] sm:$0xf]
    %v62 = vld [vmem:[#allocation5 + $0x40] sm:$0xf]
    %v63 = vld [vmem:[#allocation5 + $0x44] sm:$0xf]
    %v64 = vld [vmem:[#allocation5 + $0x48] sm:$0xf]
    %v65 = vld [vmem:[#allocation5 + $0x4c] sm:$0xf]
    %v66 = vld [vmem:[#allocation5 + $0x50] sm:$0xf]
    %v67 = vld [vmem:[#allocation5 + $0x54] sm:$0xf]
    %v68 = vld [vmem:[#allocation5 + $0x58] sm:$0xf]
    %v69 = vld [vmem:[#allocation5 + $0x5c] sm:$0xf]
    %v70 = vld [vmem:[#allocation5 + $0x60] sm:$0xf]
    %v71 = vld [vmem:[#allocation5 + $0x64] sm:$0xf]
    %v72 = vld [vmem:[#allocation5 + $0x68] sm:$0xf]
    %v73 = vld [vmem:[#allocation5 + $0x6c] sm:$0xf]
    %v74 = vld [vmem:[#allocation5 + $0x70] sm:$0xf]
    %v75 = vld [vmem:[#allocation5 + $0x74] sm:$0xf]
    %v76 = vld [vmem:[#allocation5 + $0x78] sm:$0xf]
    %v77 = vld [vmem:[#allocation5 + $0x7c] sm:$0xf]
    %v78 = vld [vmem:[%s2] sm:$0x1]
    %v80 = vlaneseq
    %v81 = vshrl.u32 %v80, 7
    %v82 = vsub.s32 0, %v81
    %v83 = vrot.slane %v78, %v82
    %v117 = vunpack.c.l.b16 %v46
    %v118 = vunpack.c.l.b16 %v47
    %v119 = vunpack.c.l.b16 %v48
    %v120 = vunpack.c.l.b16 %v49
    %v121 = vunpack.c.l.b16 %v50
    %v122 = vunpack.c.l.b16 %v51
    %v123 = vunpack.c.l.b16 %v52
    %v124 = vunpack.c.l.b16 %v53
    %v125 = vunpack.c.l.b16 %v54
    %v126 = vunpack.c.l.b16 %v55
    %v127 = vunpack.c.l.b16 %v56
    %v128 = vunpack.c.l.b16 %v57
    %v129 = vunpack.c.l.b16 %v58
    %v130 = vunpack.c.l.b16 %v59
    %v131 = vunpack.c.l.b16 %v60
    %v132 = vunpack.c.l.b16 %v61
    %v133 = vunpack.c.l.b16 %v62
    %v134 = vunpack.c.l.b16 %v63
    %v135 = vunpack.c.l.b16 %v64
    %v136 = vunpack.c.l.b16 %v65
    %v137 = vunpack.c.l.b16 %v66
    %v138 = vunpack.c.l.b16 %v67
    %v139 = vunpack.c.l.b16 %v68
    %v140 = vunpack.c.l.b16 %v69
    %v141 = vunpack.c.l.b16 %v70
    %v142 = vunpack.c.l.b16 %v71
    %v143 = vunpack.c.l.b16 %v72
    %v144 = vunpack.c.l.b16 %v73
    %v145 = vunpack.c.l.b16 %v74
    %v146 = vunpack.c.l.b16 %v75
    %v147 = vunpack.c.l.b16 %v76
    %v148 = vunpack.c.l.b16 %v77
    %v149 = vpack.c.b16 %v118, %v117
    %v150 = vpack.c.b16 %v120, %v119
    %v151 = vpack.c.b16 %v122, %v121
    %v152 = vpack.c.b16 %v124, %v123
    %v153 = vpack.c.b16 %v126, %v125
    %v154 = vpack.c.b16 %v128, %v127
    %v155 = vpack.c.b16 %v130, %v129
    %v156 = vpack.c.b16 %v132, %v131
    %v157 = vpack.c.b16 %v134, %v133
    %v158 = vpack.c.b16 %v136, %v135
    %v159 = vpack.c.b16 %v138, %v137
    %v160 = vpack.c.b16 %v140, %v139
    %v161 = vpack.c.b16 %v142, %v141
    %v162 = vpack.c.b16 %v144, %v143
    %v163 = vpack.c.b16 %v146, %v145
    %v164 = vpack.c.b16 %v148, %v147
    %181 = vmatprep.subr.bf16.mxu0 0
    %182 = vmatpush1.bf16.msra.mxu0 %v149
    %183 = vmatprep.subr.bf16.mxu0 0
    %184 = vmatpush1.bf16.msra.mxu0 %v150
    %185 = vmatprep.subr.bf16.mxu0 0
    %186 = vmatpush1.bf16.msra.mxu0 %v151
    %187 = vmatprep.subr.bf16.mxu0 0
    %188 = vmatpush1.bf16.msra.mxu0 %v152
    %189 = vmatprep.subr.bf16.mxu0 0
    %190 = vmatpush1.bf16.msra.mxu0 %v153
    %191 = vmatprep.subr.bf16.mxu0 0
    %192 = vmatpush1.bf16.msra.mxu0 %v154
    %193 = vmatprep.subr.bf16.mxu0 0
    %194 = vmatpush1.bf16.msra.mxu0 %v155
    %195 = vmatprep.subr.bf16.mxu0 0
    %196 = vmatpush1.bf16.msra.mxu0 %v156
    %197 = vmatprep.subr.bf16.mxu0 0
    %198 = vmatpush1.bf16.msra.mxu0 %v157
    %199 = vmatprep.subr.bf16.mxu0 0
    %200 = vmatpush1.bf16.msra.mxu0 %v158
    %201 = vmatprep.subr.bf16.mxu0 0
    %202 = vmatpush1.bf16.msra.mxu0 %v159
    %203 = vmatprep.subr.bf16.mxu0 0
    %204 = vmatpush1.bf16.msra.mxu0 %v160
    %205 = vmatprep.subr.bf16.mxu0 0
    %206 = vmatpush1.bf16.msra.mxu0 %v161
    %207 = vmatprep.subr.bf16.mxu0 0
    %208 = vmatpush1.bf16.msra.mxu0 %v162
    %209 = vmatprep.subr.bf16.mxu0 0
    %210 = vmatpush1.bf16.msra.mxu0 %v163
    %211 = vmatprep.subr.bf16.mxu0 0
    %212 = vmatpush1.bf16.msra.mxu0 %v164
    %213 = vmatprep.mubr.bf16.mxu0 %v45
    %214 = vmatmul.mubr.bf16.gmra.mrb[0].mxu0 %v44
    %v215 = vpop.f32.mrb[0].mxu0
    %v216 = vadd.f32 %v83, %v215
    %v217 = vpop.f32.mrb[0].mxu0
    %v218 = vpop.f32.mrb[0].mxu0
    %v219 = vpop.f32.mrb[0].mxu0
    %220 = vdwg.mxu0
    %221 = vst [vmem:[#allocation7] sm:$0xff] %v216
    // Predicated region
    $region22: #{linear_classifier.1} parent=1 // pred_check
      _
    $region23: #{linear_classifier.1} parent=1 // pred_check_branch
      %223 = sbr.rel (0) target = $region25
    $region24: #{linear_classifier.1} parent=1 // pred_region
      %s225 = ssub.s32 128, 128
      %226 = vsyncadd [#allocation4], %s225
      %s228 = sshll.u32 [#allocation7], 4
      %s229 = int_to_ptr.vmem [resolvable:$true] %s228
      %231 = dma.vmem_to_hbm [thread:$0]  %s229, 128, %s3, [#allocation4]
    $region25: #{linear_classifier.1} parent=1 // pred_fallthru
      _
    // Predicated region
    $region26: #{linear_classifier.1} parent=1 // pred_check
      _
    $region27: #{linear_classifier.1} parent=1 // pred_check_branch
      %233 = sbr.rel (0) target = $region29
    $region28: #{linear_classifier.1} parent=1 // pred_region
      %234 = dma.done [#allocation4], 128
    $region29: #{linear_classifier.1} parent=1 // pred_fallthru
      _
    %235 = vsyncpa [#allocation3], 1
    %236 = vsyncpa [#allocation6], 1
    %237 = vsyncpa [#allocation4], 1

</llo_original>
